<compile_context>
chip_gen: v7x
topology: tpu7x:2x2x1
jax: 0.10.0
libtpu: 0.0.40
codegen_flags: <defaults>
</compile_context>

<pallas_src>
import functools

import jax
import jax.numpy as jnp
from jax.experimental import pallas as pl
from jax.experimental.pallas import tpu as pltpu


def _parallel_sum_kernel(xs_ref, wk_ref, b_ref, o_ref, *, TH, W, KC, Cout):
    # xs_ref: (Hp, W, KC)   kw-stacked, zero-padded image of this batch element (bf16)
    # wk_ref: (5, KC, Cout) per-kh flattened combined (3x3 folded into 5x5) weights (bf16)
    # b_ref : (1, Cout)     combined bias (f32)
    # o_ref : (Cout, TH*W)  one band of TH output rows, channel-major (f32)
    band = pl.program_id(1)
    row0 = pl.multiple_of(band * TH, TH)
    M = TH * W

    # f32 accumulator initialised from the combined bias (no zeros + extra adds).
    acc = jnp.broadcast_to(b_ref[...], (M, Cout))

    # 5 fat MXU matmuls (one per kernel row); each contracts K = 5*Cin.
    for kh in range(5):
        win = xs_ref[pl.ds(row0 + kh, TH), :, :]              # (TH, W, KC) bf16
        acc = acc + jnp.dot(win.reshape(M, KC), wk_ref[kh],
                            preferred_element_type=jnp.float32)

    # One transpose per band -> lane-dense (lanes = TH*W) unmasked stores.
    o_ref[...] = acc.T.astype(o_ref.dtype)


def _choose_band_rows(H, W, m_cap=256):
    """Rows per output band.

    TH*W is capped (~32 vregs: the f32 accumulator is padded to 128 lanes
    regardless of Cout, so it occupies TH*W/8 vregs) and kept a multiple of 128
    so the (Cout, TH*W) output block is lane-dense and satisfies the (8,128)
    BlockSpec rule; >= 2 bands are preferred so v7x's two TensorCores both get
    work even when N is small/odd.
    """
    cands = [th for th in range(1, H + 1)
             if H % th == 0 and th * W <= m_cap and (th * W) % 128 == 0]
    if not cands:
        # Whole image per band: block == full extent is always a legal BlockSpec.
        return H
    multi = [th for th in cands if H // th >= 2]
    return max(multi) if multi else max(cands)


def parallel_operations_and_sum(x_nchw, w3, b3, w5, b5):
    """Forward of ParallelOperationsAndSum([Conv2d(k=3,p=1), Conv2d(k=5,p=2)]).

    x_nchw: (N, Cin, H, W) float32
    w3: (Cout, Cin, 3, 3)  b3: (Cout,)   (PyTorch Conv2d parameter layouts)
    w5: (Cout, Cin, 5, 5)  b5: (Cout,)
    returns: (N, Cout, H, W) float32
    """
    N, Cin, H, W = x_nchw.shape
    Cout = w3.shape[0]
    KC = 5 * Cin

    # Fold the 3x3 branch into the 5x5 branch (same input, outputs summed):
    # OIHW -> HWIO, zero-pad the 3x3 weights to 5x5, add; combine biases.
    w3_hwio = jnp.transpose(w3, (2, 3, 1, 0)).astype(jnp.float32)
    w5_hwio = jnp.transpose(w5, (2, 3, 1, 0)).astype(jnp.float32)
    w_comb = w5_hwio + jnp.pad(w3_hwio, ((1, 1), (1, 1), (0, 0), (0, 0)))
    wk = w_comb.reshape(5, KC, Cout).astype(jnp.bfloat16)      # [kh, kw*Cin + c, o]
    b_comb = (b3 + b5).reshape(1, Cout).astype(jnp.float32)

    # NCHW -> NHWC, zero-pad by 2 (enough for the 5x5 window), and
    # pre-materialise the 5 kw-shifted views so no in-kernel slice starts at an
    # unaligned sublane offset.  (In a surrounding model keep NHWC end-to-end
    # to kill the interface transposes.)
    x_nhwc = jnp.transpose(x_nchw, (0, 2, 3, 1))
    x_pad = jnp.pad(x_nhwc, ((0, 0), (2, 2), (2, 2), (0, 0)))
    xs = jnp.concatenate([x_pad[:, :, kw:kw + W, :] for kw in range(5)],
                         axis=-1).astype(jnp.bfloat16)         # (N, Hp, W, 5*Cin)
    Hp = H + 4

    TH = _choose_band_rows(H, W)
    n_bands = H // TH

    kernel = functools.partial(_parallel_sum_kernel, TH=TH, W=W, KC=KC, Cout=Cout)

    out = pl.pallas_call(
        kernel,
        out_shape=jax.ShapeDtypeStruct((N, Cout, H * W), jnp.float32),
        grid_spec=pltpu.PrefetchScalarGridSpec(
            num_scalar_prefetch=0,
            grid=(N, n_bands),
            in_specs=[
                # whole kw-stacked padded image of the current batch element
                pl.BlockSpec((pl.Squeezed(), Hp, W, KC), lambda n, j: (n, 0, 0, 0)),
                pl.BlockSpec((5, KC, Cout), lambda n, j: (0, 0, 0)),
                pl.BlockSpec((1, Cout), lambda n, j: (0, 0)),
            ],
            out_specs=pl.BlockSpec((pl.Squeezed(), Cout, TH * W),
                                   lambda n, j: (n, 0, j)),
        ),
        compiler_params=pltpu.CompilerParams(
            dimension_semantics=("parallel", "parallel"),
            vmem_limit_bytes=32 * 1024 * 1024),
    )(xs, wk, b_comb)

    # (N, Cout, H*W) -> NCHW is a free reshape (no transpose pass).
    return out.reshape(N, Cout, H, W)


if __name__ == "__main__":
    key = jax.random.PRNGKey(0)
    N, Cin, Cout, H, W = 2, 4, 8, 16, 16
    k1, k2, k3, k4, k5 = jax.random.split(key, 5)

    x = jax.random.normal(k1, (N, Cin, H, W), jnp.float32)
    # deterministic synthetic Conv2d parameters (PyTorch shapes: OIHW / (Cout,))
    w3 = jax.random.normal(k2, (Cout, Cin, 3, 3), jnp.float32) * 0.1
    b3 = jax.random.normal(k3, (Cout,), jnp.float32) * 0.1
    w5 = jax.random.normal(k4, (Cout, Cin, 5, 5), jnp.float32) * 0.1
    b5 = jax.random.normal(k5, (Cout,), jnp.float32) * 0.1

    out = parallel_operations_and_sum(x, w3, b3, w5, b5)
    out = jax.block_until_ready(out)

    # Pure-JAX reference of the same forward pass (sum of the two conv branches).
    # The kernel quantises activations/weights to bf16 (f32 accumulation), so the
    # reference uses the same bf16-rounded values; remaining differences are
    # accumulation order and the one-time f32 weight fold (covered by 1e-2).
    def bf16(v):
        return v.astype(jnp.bfloat16).astype(jnp.float32)

    def conv(x_, w_, b_, p_):
        y = jax.lax.conv_general_dilated(
            x_, w_, (1, 1), [(p_, p_), (p_, p_)],
            dimension_numbers=("NCHW", "OIHW", "NCHW"))
        return y + b_[None, :, None, None]

    ref = conv(bf16(x), bf16(w3), b3, 1) + conv(bf16(x), bf16(w5), b5, 2)
    assert out.shape == ref.shape == (N, Cout, H, W)
    assert jnp.allclose(out, ref, atol=1e-2, rtol=1e-2)
    print("KERNEL_OK")
</pallas_src>

<mosaic_0001>
module attributes {stable_mosaic.version = 11 : i64} {
  func.func @_parallel_sum_kernel(%arg0: i32, %arg1: i32, %arg2: memref<1x20x16x20xbf16, #tpu.memory_space<vmem>>, %arg3: memref<5x20x8xbf16, #tpu.memory_space<vmem>>, %arg4: memref<1x8xf32, #tpu.memory_space<vmem>>, %arg5: memref<1x8x128xf32, #tpu.memory_space<vmem>>) attributes {dimension_semantics = [#tpu.dimension_semantics<parallel>, #tpu.dimension_semantics<parallel>], iteration_bounds = array<i64: 2, 2>, scalar_prefetch = 0 : i64, scratch_operands = 0 : i64, tpu.core_type = #tpu.core_type<tc>, window_params = [{transform_indices = @transform_0, window_bounds = array<i64: 1, 20, 16, 20>}, {pipeline_mode = #tpu.pipeline_mode<synchronous>, transform_indices = @transform_1, window_bounds = array<i64: 5, 20, 8>}, {pipeline_mode = #tpu.pipeline_mode<synchronous>, transform_indices = @transform_2, window_bounds = array<i64: 1, 8>}, {transform_indices = @transform_3, window_bounds = array<i64: 1, 8, 128>}]} {
    %c8_i32 = arith.constant 8 : i32
    %0 = arith.muli %arg1, %c8_i32 : i32
    %1 = tpu.assume_multiple %0, 8 : i32
    %c0 = arith.constant 0 : index
    %c0_0 = arith.constant 0 : index
    %2 = vector.load %arg4[%c0, %c0_0] : memref<1x8xf32, #tpu.memory_space<vmem>>, vector<1x8xf32>
    %3 = vector.shape_cast %2 : vector<1x8xf32> to vector<1x8xf32>
    %4 = vector.broadcast %3 : vector<1x8xf32> to vector<128x8xf32>
    %c0_i32 = arith.constant 0 : i32
    %5 = arith.addi %1, %c0_i32 : i32
    %c0_1 = arith.constant 0 : index
    %6 = arith.index_cast %5 : i32 to index
    %c0_2 = arith.constant 0 : index
    %c0_3 = arith.constant 0 : index
    %7 = vector.load %arg2[%c0_1, %6, %c0_2, %c0_3] : memref<1x20x16x20xbf16, #tpu.memory_space<vmem>>, vector<1x8x16x20xbf16>
    %8 = vector.shape_cast %7 : vector<1x8x16x20xbf16> to vector<8x16x20xbf16>
    %9 = vector.shape_cast %8 : vector<8x16x20xbf16> to vector<128x20xbf16>
    %c0_4 = arith.constant 0 : index
    %c0_5 = arith.constant 0 : index
    %c0_6 = arith.constant 0 : index
    %10 = vector.load %arg3[%c0_4, %c0_5, %c0_6] : memref<5x20x8xbf16, #tpu.memory_space<vmem>>, vector<1x20x8xbf16>
    %11 = vector.shape_cast %10 : vector<1x20x8xbf16> to vector<20x8xbf16>
    %cst = arith.constant dense<0.000000e+00> : vector<128x8xf32>
    %12 = tpu.matmul %9, %11, %cst {dimension_numbers = #tpu.dot_dimension_numbers<[1], [0], [0], [1], [0, 0, 1, 1], [], []>} : vector<128x20xbf16>, vector<20x8xbf16>, vector<128x8xf32> -> vector<128x8xf32>
    %13 = arith.addf %4, %12 : vector<128x8xf32>
    %c1_i32 = arith.constant 1 : i32
    %14 = arith.addi %1, %c1_i32 : i32
    %c0_7 = arith.constant 0 : index
    %15 = arith.index_cast %14 : i32 to index
    %c0_8 = arith.constant 0 : index
    %c0_9 = arith.constant 0 : index
    %16 = vector.load %arg2[%c0_7, %15, %c0_8, %c0_9] : memref<1x20x16x20xbf16, #tpu.memory_space<vmem>>, vector<1x8x16x20xbf16>
    %17 = vector.shape_cast %16 : vector<1x8x16x20xbf16> to vector<8x16x20xbf16>
    %18 = vector.shape_cast %17 : vector<8x16x20xbf16> to vector<128x20xbf16>
    %c1 = arith.constant 1 : index
    %c0_10 = arith.constant 0 : index
    %c0_11 = arith.constant 0 : index
    %19 = vector.load %arg3[%c1, %c0_10, %c0_11] : memref<5x20x8xbf16, #tpu.memory_space<vmem>>, vector<1x20x8xbf16>
    %20 = vector.shape_cast %19 : vector<1x20x8xbf16> to vector<20x8xbf16>
    %cst_12 = arith.constant dense<0.000000e+00> : vector<128x8xf32>
    %21 = tpu.matmul %18, %20, %cst_12 {dimension_numbers = #tpu.dot_dimension_numbers<[1], [0], [0], [1], [0, 0, 1, 1], [], []>} : vector<128x20xbf16>, vector<20x8xbf16>, vector<128x8xf32> -> vector<128x8xf32>
    %22 = arith.addf %13, %21 : vector<128x8xf32>
    %c2_i32 = arith.constant 2 : i32
    %23 = arith.addi %1, %c2_i32 : i32
    %c0_13 = arith.constant 0 : index
    %24 = arith.index_cast %23 : i32 to index
    %c0_14 = arith.constant 0 : index
    %c0_15 = arith.constant 0 : index
    %25 = vector.load %arg2[%c0_13, %24, %c0_14, %c0_15] : memref<1x20x16x20xbf16, #tpu.memory_space<vmem>>, vector<1x8x16x20xbf16>
    %26 = vector.shape_cast %25 : vector<1x8x16x20xbf16> to vector<8x16x20xbf16>
    %27 = vector.shape_cast %26 : vector<8x16x20xbf16> to vector<128x20xbf16>
    %c2 = arith.constant 2 : index
    %c0_16 = arith.constant 0 : index
    %c0_17 = arith.constant 0 : index
    %28 = vector.load %arg3[%c2, %c0_16, %c0_17] : memref<5x20x8xbf16, #tpu.memory_space<vmem>>, vector<1x20x8xbf16>
    %29 = vector.shape_cast %28 : vector<1x20x8xbf16> to vector<20x8xbf16>
    %cst_18 = arith.constant dense<0.000000e+00> : vector<128x8xf32>
    %30 = tpu.matmul %27, %29, %cst_18 {dimension_numbers = #tpu.dot_dimension_numbers<[1], [0], [0], [1], [0, 0, 1, 1], [], []>} : vector<128x20xbf16>, vector<20x8xbf16>, vector<128x8xf32> -> vector<128x8xf32>
    %31 = arith.addf %22, %30 : vector<128x8xf32>
    %c3_i32 = arith.constant 3 : i32
    %32 = arith.addi %1, %c3_i32 : i32
    %c0_19 = arith.constant 0 : index
    %33 = arith.index_cast %32 : i32 to index
    %c0_20 = arith.constant 0 : index
    %c0_21 = arith.constant 0 : index
    %34 = vector.load %arg2[%c0_19, %33, %c0_20, %c0_21] : memref<1x20x16x20xbf16, #tpu.memory_space<vmem>>, vector<1x8x16x20xbf16>
    %35 = vector.shape_cast %34 : vector<1x8x16x20xbf16> to vector<8x16x20xbf16>
    %36 = vector.shape_cast %35 : vector<8x16x20xbf16> to vector<128x20xbf16>
    %c3 = arith.constant 3 : index
    %c0_22 = arith.constant 0 : index
    %c0_23 = arith.constant 0 : index
    %37 = vector.load %arg3[%c3, %c0_22, %c0_23] : memref<5x20x8xbf16, #tpu.memory_space<vmem>>, vector<1x20x8xbf16>
    %38 = vector.shape_cast %37 : vector<1x20x8xbf16> to vector<20x8xbf16>
    %cst_24 = arith.constant dense<0.000000e+00> : vector<128x8xf32>
    %39 = tpu.matmul %36, %38, %cst_24 {dimension_numbers = #tpu.dot_dimension_numbers<[1], [0], [0], [1], [0, 0, 1, 1], [], []>} : vector<128x20xbf16>, vector<20x8xbf16>, vector<128x8xf32> -> vector<128x8xf32>
    %40 = arith.addf %31, %39 : vector<128x8xf32>
    %c4_i32 = arith.constant 4 : i32
    %41 = arith.addi %1, %c4_i32 : i32
    %c0_25 = arith.constant 0 : index
    %42 = arith.index_cast %41 : i32 to index
    %c0_26 = arith.constant 0 : index
    %c0_27 = arith.constant 0 : index
    %43 = vector.load %arg2[%c0_25, %42, %c0_26, %c0_27] : memref<1x20x16x20xbf16, #tpu.memory_space<vmem>>, vector<1x8x16x20xbf16>
    %44 = vector.shape_cast %43 : vector<1x8x16x20xbf16> to vector<8x16x20xbf16>
    %45 = vector.shape_cast %44 : vector<8x16x20xbf16> to vector<128x20xbf16>
    %c4 = arith.constant 4 : index
    %c0_28 = arith.constant 0 : index
    %c0_29 = arith.constant 0 : index
    %46 = vector.load %arg3[%c4, %c0_28, %c0_29] : memref<5x20x8xbf16, #tpu.memory_space<vmem>>, vector<1x20x8xbf16>
    %47 = vector.shape_cast %46 : vector<1x20x8xbf16> to vector<20x8xbf16>
    %cst_30 = arith.constant dense<0.000000e+00> : vector<128x8xf32>
    %48 = tpu.matmul %45, %47, %cst_30 {dimension_numbers = #tpu.dot_dimension_numbers<[1], [0], [0], [1], [0, 0, 1, 1], [], []>} : vector<128x20xbf16>, vector<20x8xbf16>, vector<128x8xf32> -> vector<128x8xf32>
    %49 = arith.addf %40, %48 : vector<128x8xf32>
    %50 = tpu.transpose %49, [1, 0] : vector<128x8xf32> -> vector<8x128xf32>
    %c0_31 = arith.constant 0 : index
    %c0_32 = arith.constant 0 : index
    %c0_33 = arith.constant 0 : index
    %51 = vector.load %arg5[%c0_31, %c0_32, %c0_33] : memref<1x8x128xf32, #tpu.memory_space<vmem>>, vector<1x8x128xf32>
    %52 = vector.shape_cast %51 : vector<1x8x128xf32> to vector<8x128xf32>
    %53 = vector.shape_cast %50 : vector<8x128xf32> to vector<1x8x128xf32>
    tpu.vector_store %arg5[%c0_31, %c0_32, %c0_33], %53 {strides = array<i32>} : memref<1x8x128xf32, #tpu.memory_space<vmem>>, vector<1x8x128xf32>,
    return
  }
  func.func @transform_0(%arg0: i32, %arg1: i32) -> (i32, i32, i32, i32) {
    %c0_i32 = arith.constant 0 : i32
    %c0_i32_0 = arith.constant 0 : i32
    %c0_i32_1 = arith.constant 0 : i32
    %c0_i32_2 = arith.constant 0 : i32
    return %arg0, %c0_i32, %c0_i32_0, %c0_i32_1 : i32, i32, i32, i32
  }
  func.func @transform_1(%arg0: i32, %arg1: i32) -> (i32, i32, i32) {
    %c0_i32 = arith.constant 0 : i32
    %c0_i32_0 = arith.constant 0 : i32
    %c0_i32_1 = arith.constant 0 : i32
    %c0_i32_2 = arith.constant 0 : i32
    return %c0_i32, %c0_i32_0, %c0_i32_1 : i32, i32, i32
  }
  func.func @transform_2(%arg0: i32, %arg1: i32) -> (i32, i32) {
    %c0_i32 = arith.constant 0 : i32
    %c0_i32_0 = arith.constant 0 : i32
    %c0_i32_1 = arith.constant 0 : i32
    return %c0_i32, %c0_i32_0 : i32, i32
  }
  func.func @transform_3(%arg0: i32, %arg1: i32) -> (i32, i32, i32) {
    %c0_i32 = arith.constant 0 : i32
    %c0_i32_0 = arith.constant 0 : i32
    return %arg0, %c0_i32, %arg1 : i32, i32, i32
  }
}

</mosaic_0001>

<llo_original>
// kernel: tpu_custom_call.1
$region0: #{tpu_custom_call.1}
  #allocation0 [shape = 'u32[]', space=smem, size = 0x4, offset = 0x4, fixed_abs, tag = 'smem constant byte address 0x4 - core index']
  #allocation1 [shape = 'u32[144,128]{1,0:T(1,128)}', space=vmem, size = 0x12000, scoped, tag = 'internal scratch']
  %s0 = inlined_call_operand.hbm [shape: bf16[2,20,16,20], index: 0, kind: input, shape index: {}]
  %s1 = inlined_call_operand.vmem [shape: bf16[5,20,8], index: 1, kind: input, shape index: {}]
  %s2 = inlined_call_operand.vmem [shape: f32[1,8], index: 2, kind: input, shape index: {}]
  %s3 = inlined_call_operand.hbm [shape: f32[2,8,256], index: 3, kind: output, shape index: {}]
  %s4 = sld [smem:[#allocation0]]
  $region49: #{tpu_custom_call.1} parent=0
    _
  %s6 = ssub.s32 1, %s4
  %s7 = scalar_select 0, %s6, %s4
  $region1: #{tpu_custom_call.1} parent=0
    #allocation2 [shape = 'u8[163840]{0}', space=vmem, size = 0x28000, scoped, tag = 'input window, operand 0']
    #allocation3 [shape = 's32[2]{0}', space=sflag, size = 0x8, scoped, tag = 'scoped memory for tpu_custom_call.1']
    #allocation4 [shape = 's32[2]{0}', space=sflag, size = 0x8, scoped, tag = 'scoped memory for tpu_custom_call.1']
    #allocation5 [shape = 'u8[8192]{0}', space=vmem, size = 0x2000, scoped, tag = 'output window, operand 0']
    %8 = vsyncpa [#allocation3], 0
    %s9 = scalar_lea.sflag [#allocation3], 1
    %10 = vsyncpa %s9, 0
    %11 = vsyncpa [#allocation4], 0
    %s12 = scalar_lea.sflag [#allocation4], 1
    %13 = vsyncpa %s12, 0
    loop: start=0, step=1, limit=6
    $region2: #{tpu_custom_call.1} parent=1 // loop_pre_header
      _
    $region3: #{tpu_custom_call.1} parent=1 // loop_header
      %s15 = sphi 0, %s19
      %p16 = scmp.ge.s32.totalorder %s15, 6
      %s22 = sphi 0, %s34
      %s23 = sphi 0, %s30
      %s24 = sphi 0, %s22
      %s25 = sphi 0, %s23
      %s26 = sphi 0, %s24
      %s27 = sphi 0, %s25
      %s37 = sphi 0, %s39
      %s40 = sphi 0, %s37
      %s41 = sphi 0, %s40
      %s57 = sphi 0, %s41
      %s61 = sphi 0, %s61
      %s63 = sphi 0, %s61
      %s64 = sphi 0, %s63
      %s78 = sphi 0, %s64
      %s82 = sphi 0, %s82
      %s84 = sphi 0, %s82
      %s85 = sphi 0, %s84
      %s99 = sphi 0, %s85
      %s107 = sphi 0, %s109
      %s110 = sphi 0, %s107
      %s111 = sphi 0, %s110
      %s127 = sphi 0, %s111
    $region4: #{tpu_custom_call.1} parent=1 // loop_header_branch
      %18 = sbr.rel (%p16) target = $region8
    $region5: #{tpu_custom_call.1} parent=1 // loop_body
      %s20 = ssub.s32 %s15, 1
      %s21 = ssub.s32 %s15, 2
      %s28 = sadd.s32 1, %s23
      %p29 = scmp.ge.s32.totalorder %s28, 2
      %s30 = scalar_select %p29, 0, %s28
      %s31 = sadd.s32 1, %s22
      %s32 = scalar_select %p29, %s31, %s22
      %p33 = scmp.ge.s32.totalorder %s32, 2
      %s34 = scalar_select %p33, 0, %s32
      %s35 = ssub.s32 %s22, %s34
      %p36 = scmp.eq.s32.totalorder %s35, 0
      %s38 = sadd.s32 %s37, 1
      %s39 = scalar_select %p36, %s37, %s38
      %p42 = pneg %p36
      %p43 = scmp.eq.s32.totalorder %s15, 3
      %p44 = por %p42, %p43
      %p45 = scmp.ne.s32.totalorder %s37, %s40
      %p46 = scmp.eq.s32.totalorder %s15, 0
      %p47 = por %p45, %p46
      %p48 = scmp.ne.s32.totalorder %s37, %s40
      %p49 = scmp.eq.s32.totalorder %s20, 3
      %p50 = por %p48, %p49
      %p51 = scmp.ne.s32.totalorder %s40, %s41
      %p52 = scmp.eq.s32.totalorder %s20, 0
      %p53 = por %p51, %p52
      %p54 = scmp.ne.s32.totalorder %s40, %s41
      %p55 = scmp.eq.s32.totalorder %s21, 3
      %p56 = por %p54, %p55
      %p58 = scmp.ne.s32.totalorder %s41, %s57
      %p59 = scmp.eq.s32.totalorder %s21, 0
      %p60 = por %p58, %p59
      %s62 = sadd.s32 %s61, 1
      %p65 = scmp.eq.s32.totalorder %s15, 3
      %p66 = scmp.ne.s32.totalorder %s61, %s63
      %p67 = scmp.eq.s32.totalorder %s15, 0
      %p68 = por %p66, %p67
      %p69 = scmp.ne.s32.totalorder %s61, %s63
      %p70 = scmp.eq.s32.totalorder %s20, 3
      %p71 = por %p69, %p70
      %p72 = scmp.ne.s32.totalorder %s63, %s64
      %p73 = scmp.eq.s32.totalorder %s20, 0
      %p74 = por %p72, %p73
      %p75 = scmp.ne.s32.totalorder %s63, %s64
      %p76 = scmp.eq.s32.totalorder %s21, 3
      %p77 = por %p75, %p76
      %p79 = scmp.ne.s32.totalorder %s64, %s78
      %p80 = scmp.eq.s32.totalorder %s21, 0
      %p81 = por %p79, %p80
      %s83 = sadd.s32 %s82, 1
      %p86 = scmp.eq.s32.totalorder %s15, 3
      %p87 = scmp.ne.s32.totalorder %s82, %s84
      %p88 = scmp.eq.s32.totalorder %s15, 0
      %p89 = por %p87, %p88
      %p90 = scmp.ne.s32.totalorder %s82, %s84
      %p91 = scmp.eq.s32.totalorder %s20, 3
      %p92 = por %p90, %p91
      %p93 = scmp.ne.s32.totalorder %s84, %s85
      %p94 = scmp.eq.s32.totalorder %s20, 0
      %p95 = por %p93, %p94
      %p96 = scmp.ne.s32.totalorder %s84, %s85
      %p97 = scmp.eq.s32.totalorder %s21, 3
      %p98 = por %p96, %p97
      %p100 = scmp.ne.s32.totalorder %s85, %s99
      %p101 = scmp.eq.s32.totalorder %s21, 0
      %p102 = por %p100, %p101
      %s103 = ssub.s32 %s22, %s34
      %s104 = ssub.s32 %s23, %s30
      %s105 = sor.u32 %s103, %s104
      %p106 = scmp.eq.s32.totalorder %s105, 0
      %s108 = sadd.s32 %s107, 1
      %s109 = scalar_select %p106, %s107, %s108
      %p112 = pneg %p106
      %p113 = scmp.eq.s32.totalorder %s15, 3
      %p114 = por %p112, %p113
      %p115 = scmp.ne.s32.totalorder %s107, %s110
      %p116 = scmp.eq.s32.totalorder %s15, 0
      %p117 = por %p115, %p116
      %p118 = scmp.ne.s32.totalorder %s107, %s110
      %p119 = scmp.eq.s32.totalorder %s20, 3
      %p120 = por %p118, %p119
      %p121 = scmp.ne.s32.totalorder %s110, %s111
      %p122 = scmp.eq.s32.totalorder %s20, 0
      %p123 = por %p121, %p122
      %p124 = scmp.ne.s32.totalorder %s110, %s111
      %p125 = scmp.eq.s32.totalorder %s21, 3
      %p126 = por %p124, %p125
      %p128 = scmp.ne.s32.totalorder %s111, %s127
      %p129 = scmp.eq.s32.totalorder %s21, 0
      %p130 = por %p128, %p129
      %p131 = scmp.le.s32.totalorder 1, %s15
      %p132 = scmp.lt.s32.totalorder %s15, 5
      %p133 = pnand %p131, %p132
      %p134 = pneg %p133
      // Predicated region
      $region9: #{tpu_custom_call.1} parent=5 // pred_check
        _
      $region10: #{tpu_custom_call.1} parent=5 // pred_check_branch
        %136 = sbr.rel (%p133) target = $region12
      $region11: #{tpu_custom_call.1} parent=5 // pred_region
        %s137 = ssub.s32 %s15, 1
        // Predicated region
        $region13: #{tpu_custom_call.1} parent=11 // pred_check
          %p138 = pneg %p74
        $region14: #{tpu_custom_call.1} parent=11 // pred_check_branch
          %140 = sbr.rel (%p138) target = $region16
        $region15: #{tpu_custom_call.1} parent=11 // pred_region
          _
        $region16: #{tpu_custom_call.1} parent=11 // pred_fallthru
          _
        // Predicated region
        $region17: #{tpu_custom_call.1} parent=11 // pred_check
          %p141 = pneg %p95
        $region18: #{tpu_custom_call.1} parent=11 // pred_check_branch
          %143 = sbr.rel (%p141) target = $region20
        $region19: #{tpu_custom_call.1} parent=11 // pred_region
          _
        $region20: #{tpu_custom_call.1} parent=11 // pred_fallthru
          _
      $region12: #{tpu_custom_call.1} parent=5 // pred_fallthru
        _
      %p144 = scmp.lt.s32.totalorder %s15, 4
      // Predicated region
      $region21: #{tpu_custom_call.1} parent=5 // pred_check
        %p145 = pneg %p144
      $region22: #{tpu_custom_call.1} parent=5 // pred_check_branch
        %147 = sbr.rel (%p145) target = $region24
      $region23: #{tpu_custom_call.1} parent=5 // pred_region
        // Predicated region
        $region25: #{tpu_custom_call.1} parent=23 // pred_check
          %p148 = pneg %p47
        $region26: #{tpu_custom_call.1} parent=23 // pred_check_branch
          %150 = sbr.rel (%p148) target = $region28
        $region27: #{tpu_custom_call.1} parent=23 // pred_region
          %s151 = sand.u32 %s37, 1
          %s152 = scalar_lea.sflag [#allocation3], %s151
          %s153 = sand.u32 %s37, 1
          %s154 = smul.addr %s153, 160
          %s155 = scalar_lea.vmem [#allocation2], %s154
          %s157 = ssub.s32 2560, 2560
          %158 = vsyncadd %s152, %s157
          %s159 = smul.addr %s22, 40
          %s160 = smul.addr %s159, 64
          %s161 = scalar_lea.hbm %s0, %s160
          %s162 = sshll.u32 %s155, 4
          %s163 = int_to_ptr.vmem [resolvable:$true] %s162
          %168 = dma.hbm_to_vmem [thread:$0]  %s161, 2560, %s163, %s152, 64, 64, 4
        $region28: #{tpu_custom_call.1} parent=23 // pred_fallthru
          _
      $region24: #{tpu_custom_call.1} parent=5 // pred_fallthru
        _
      %p169 = scmp.le.s32.totalorder 1, %s15
      %p170 = scmp.lt.s32.totalorder %s15, 5
      %p171 = pnand %p169, %p170
      %p172 = pneg %p171
      // Predicated region
      $region29: #{tpu_custom_call.1} parent=5 // pred_check
        _
      $region30: #{tpu_custom_call.1} parent=5 // pred_check_branch
        %174 = sbr.rel (%p171) target = $region32
      $region31: #{tpu_custom_call.1} parent=5 // pred_region
        %s175 = ssub.s32 %s15, 1
        %s176 = sand.u32 %s40, 1
        %s177 = scalar_lea.sflag [#allocation3], %s176
        %s178 = sand.u32 %s40, 1
        %s179 = smul.addr %s178, 160
        %s180 = scalar_lea.vmem [#allocation2], %s179
        // Predicated region
        $region33: #{tpu_custom_call.1} parent=31 // pred_check
          %p181 = pneg %p53
        $region34: #{tpu_custom_call.1} parent=31 // pred_check_branch
          %183 = sbr.rel (%p181) target = $region36
        $region35: #{tpu_custom_call.1} parent=31 // pred_region
          %184 = dma.done %s177, 2560
        $region36: #{tpu_custom_call.1} parent=31 // pred_fallthru
          _
        %s185 = sand.u32 %s40, 1
        %s186 = scalar_lea.sflag [#allocation3], %s185
        %s187 = sand.u32 %s40, 1
        %s188 = smul.addr %s187, 160
        %s189 = scalar_lea.vmem [#allocation2], %s188
        %p190 = pneg %p53
        %p191 = pneg %p50
        %p192 = pneg %p74
        %p193 = pneg %p71
        %p194 = pneg %p95
        %p195 = pneg %p92
        %p196 = pneg %p123
        %p197 = pneg %p120
        %s198 = sand.u32 %s110, 1
        %s199 = scalar_lea.sflag [#allocation4], %s198
        %s200 = sand.u32 %s110, 1
        %s201 = smul.addr %s200, 8
        %s202 = scalar_lea.vmem [#allocation5], %s201
        %s204 = smul.u32 %s25, 8
        %v205 = vld [vmem:[%s2] sm:$0x1]
        %v207 = vlaneseq
        %v208 = vshrl.u32 %v207, 7
        %v209 = vsub.s32 0, %v208
        %v210 = vrot.slane %v205, %v209
        %s212 = smul.u32 %s204, 2
        %s213 = smul.addr %s212, 4
        %s214 = scalar_lea.vmem %s180, %s213 [#allocation2]
        %v215 = vld [vmem:[%s214] sm:$0xf]
        %v216 = vld [vmem:[%s214 + $0x4] sm:$0xf]
        %v217 = vld [vmem:[%s214 + $0x8] sm:$0xf]
        %v218 = vld [vmem:[%s214 + $0xc] sm:$0xf]
        %v219 = vld [vmem:[%s214 + $0x10] sm:$0xf]
        %v220 = vld [vmem:[%s214 + $0x14] sm:$0xf]
        %v221 = vld [vmem:[%s214 + $0x18] sm:$0xf]
        %v222 = vld [vmem:[%s214 + $0x1c] sm:$0xf]
        %v223 = vld [vmem:[%s214 + $0x20] sm:$0xf]
        %v224 = vld [vmem:[%s214 + $0x24] sm:$0xf]
        %v225 = vld [vmem:[%s214 + $0x28] sm:$0xf]
        %v226 = vld [vmem:[%s214 + $0x2c] sm:$0xf]
        %v227 = vld [vmem:[%s214 + $0x30] sm:$0xf]
        %v228 = vld [vmem:[%s214 + $0x34] sm:$0xf]
        %v229 = vld [vmem:[%s214 + $0x38] sm:$0xf]
        %v230 = vld [vmem:[%s214 + $0x3c] sm:$0xf]
        %v231 = vld [vmem:[%s1] sm:$0xf]
        %v232 = vld [vmem:[%s1 + $0x4] sm:$0xf]
        %v233 = vld [vmem:[%s1 + $0x8] sm:$0x3]
        %v250 = vunpack.c.l.b16 %v215
        %v251 = vunpack.c.l.b16 %v216
        %v252 = vunpack.c.l.b16 %v217
        %v253 = vunpack.c.l.b16 %v218
        %v254 = vunpack.c.l.b16 %v219
        %v255 = vunpack.c.l.b16 %v220
        %v256 = vunpack.c.l.b16 %v221
        %v257 = vunpack.c.l.b16 %v222
        %v258 = vunpack.c.l.b16 %v223
        %v259 = vunpack.c.l.b16 %v224
        %v260 = vunpack.c.l.b16 %v225
        %v261 = vunpack.c.l.b16 %v226
        %v262 = vunpack.c.l.b16 %v227
        %v263 = vunpack.c.l.b16 %v228
        %v264 = vunpack.c.l.b16 %v229
        %v265 = vunpack.c.l.b16 %v230
        %v266 = vpack.c.b16 %v251, %v250
        %v267 = vpack.c.b16 %v253, %v252
        %v268 = vpack.c.b16 %v255, %v254
        %v269 = vpack.c.b16 %v257, %v256
        %v270 = vpack.c.b16 %v259, %v258
        %v271 = vpack.c.b16 %v261, %v260
        %v272 = vpack.c.b16 %v263, %v262
        %v273 = vpack.c.b16 %v265, %v264
        %v277 = vunpack.c.l.b16 %v231
        %v278 = vunpack.c.l.b16 %v232
        %v279 = vunpack.c.l.b16 %v233
        %v280 = vpack.c.b16 %v278, %v277
        %v281 = vpack.c.b16 %v279, %v279
        %vm283 = vcmask 162816
        %v285 = vsel %vm283, %v266, 0
        %v288 = vsel %vm283, %v267, 0
        %v291 = vsel %vm283, %v268, 0
        %v294 = vsel %vm283, %v269, 0
        %v297 = vsel %vm283, %v270, 0
        %v300 = vsel %vm283, %v271, 0
        %v303 = vsel %vm283, %v272, 0
        %v306 = vsel %vm283, %v273, 0
        %vm308 = vcmask 1041408
        %v310 = vsel %vm308, %v281, 0
        %312 = vmatprep.subr.bf16.mxu0 0
        %313 = vmatpush1.bf16.msra.mxu0 %v280
        %314 = vmatprep.subr.bf16.mxu0 0
        %315 = vmatpush1.bf16.msra.mxu0 %v310
        %316 = vmatprep.subr.bf16.mxu0 0
        %317 = vmatpush1.bf16.msra.mxu0 0
        %318 = vmatprep.subr.bf16.mxu0 0
        %319 = vmatpush1.bf16.msra.mxu0 0
        %320 = vmatprep.subr.bf16.mxu0 0
        %321 = vmatpush1.bf16.msra.mxu0 0
        %322 = vmatprep.subr.bf16.mxu0 0
        %323 = vmatpush1.bf16.msra.mxu0 0
        %324 = vmatprep.subr.bf16.mxu0 0
        %325 = vmatpush1.bf16.msra.mxu0 0
        %326 = vmatprep.subr.bf16.mxu0 0
        %327 = vmatpush1.bf16.msra.mxu0 0
        %328 = vmatprep.subr.bf16.mxu0 0
        %329 = vmatpush1.bf16.msra.mxu0 0
        %330 = vmatprep.subr.bf16.mxu0 0
        %331 = vmatpush1.bf16.msra.mxu0 0
        %332 = vmatprep.subr.bf16.mxu0 0
        %333 = vmatpush1.bf16.msra.mxu0 0
        %334 = vmatprep.subr.bf16.mxu0 0
        %335 = vmatpush1.bf16.msra.mxu0 0
        %336 = vmatprep.subr.bf16.mxu0 0
        %337 = vmatpush1.bf16.msra.mxu0 0
        %338 = vmatprep.subr.bf16.mxu0 0
        %339 = vmatpush1.bf16.msra.mxu0 0
        %340 = vmatprep.subr.bf16.mxu0 0
        %341 = vmatpush1.bf16.msra.mxu0 0
        %342 = vmatprep.subr.bf16.mxu0 0
        %343 = vmatpush1.bf16.msra.mxu0 0
        %344 = vmatprep.mubr.bf16.mxu0 0
        %345 = vmatmul.mubr.bf16.gmra.mrb[0].mxu0 %v285
        %v346 = vpop.f32.mrb[0].mxu0
        %v347 = vadd.f32 0.0, %v346
        %v348 = vpop.f32.mrb[0].mxu0
        %v349 = vpop.f32.mrb[0].mxu0
        %v350 = vadd.f32 0.0, %v349
        %v351 = vpop.f32.mrb[0].mxu0
        %352 = vmatprep.mubr.bf16.mxu0 0
        %353 = vmatmul.mubr.bf16.gmra.mrb[0].mxu0 %v288
        %v354 = vpop.f32.mrb[0].mxu0
        %v355 = vadd.f32 0.0, %v354
        %v356 = vpop.f32.mrb[0].mxu0
        %v357 = vpop.f32.mrb[0].mxu0
        %v358 = vadd.f32 0.0, %v357
        %v359 = vpop.f32.mrb[0].mxu0
        %360 = vmatprep.mubr.bf16.mxu0 0
        %361 = vmatmul.mubr.bf16.gmra.mrb[0].mxu0 %v291
        %v362 = vpop.f32.mrb[0].mxu0
        %v363 = vadd.f32 0.0, %v362
        %v364 = vpop.f32.mrb[0].mxu0
        %v365 = vpop.f32.mrb[0].mxu0
        %v366 = vadd.f32 0.0, %v365
        %v367 = vpop.f32.mrb[0].mxu0
        %368 = vmatprep.mubr.bf16.mxu0 0
        %369 = vmatmul.mubr.bf16.gmra.mrb[0].mxu0 %v294
        %v370 = vpop.f32.mrb[0].mxu0
        %v371 = vadd.f32 0.0, %v370
        %v372 = vpop.f32.mrb[0].mxu0
        %v373 = vpop.f32.mrb[0].mxu0
        %v374 = vadd.f32 0.0, %v373
        %v375 = vpop.f32.mrb[0].mxu0
        %376 = vmatprep.mubr.bf16.mxu0 0
        %377 = vmatmul.mubr.bf16.gmra.mrb[0].mxu0 %v297
        %v378 = vpop.f32.mrb[0].mxu0
        %v379 = vadd.f32 0.0, %v378
        %v380 = vpop.f32.mrb[0].mxu0
        %v381 = vpop.f32.mrb[0].mxu0
        %v382 = vadd.f32 0.0, %v381
        %v383 = vpop.f32.mrb[0].mxu0
        %384 = vmatprep.mubr.bf16.mxu0 0
        %385 = vmatmul.mubr.bf16.gmra.mrb[0].mxu0 %v300
        %v386 = vpop.f32.mrb[0].mxu0
        %v387 = vadd.f32 0.0, %v386
        %v388 = vpop.f32.mrb[0].mxu0
        %v389 = vpop.f32.mrb[0].mxu0
        %v390 = vadd.f32 0.0, %v389
        %v391 = vpop.f32.mrb[0].mxu0
        %392 = vmatprep.mubr.bf16.mxu0 0
        %393 = vmatmul.mubr.bf16.gmra.mrb[0].mxu0 %v303
        %v394 = vpop.f32.mrb[0].mxu0
        %v395 = vadd.f32 0.0, %v394
        %v396 = vpop.f32.mrb[0].mxu0
        %v397 = vpop.f32.mrb[0].mxu0
        %v398 = vadd.f32 0.0, %v397
        %v399 = vpop.f32.mrb[0].mxu0
        %400 = vmatprep.mubr.bf16.mxu0 0
        %401 = vmatmul.mubr.bf16.gmra.mrb[0].mxu0 %v306
        %v402 = vpop.f32.mrb[0].mxu0
        %v403 = vadd.f32 0.0, %v402
        %v404 = vpop.f32.mrb[0].mxu0
        %v405 = vpop.f32.mrb[0].mxu0
        %v406 = vadd.f32 0.0, %v405
        %v407 = vpop.f32.mrb[0].mxu0
        %408 = vdwg.mxu0
        %v409 = vadd.f32 %v210, %v347
        %v410 = vadd.f32 %v210, %v350
        %v411 = vadd.f32 %v210, %v355
        %v412 = vadd.f32 %v210, %v358
        %v413 = vadd.f32 %v210, %v363
        %v414 = vadd.f32 %v210, %v366
        %v415 = vadd.f32 %v210, %v371
        %v416 = vadd.f32 %v210, %v374
        %v417 = vadd.f32 %v210, %v379
        %v418 = vadd.f32 %v210, %v382
        %v419 = vadd.f32 %v210, %v387
        %v420 = vadd.f32 %v210, %v390
        %v421 = vadd.f32 %v210, %v395
        %v422 = vadd.f32 %v210, %v398
        %v423 = vadd.f32 %v210, %v403
        %v424 = vadd.f32 %v210, %v406
        %s425 = sadd.s32 %s204, 1
        %s426 = smul.u32 %s425, 2
        %s427 = smul.addr %s426, 4
        %s428 = scalar_lea.vmem %s180, %s427 [#allocation2]
        %v429 = vld [vmem:[%s428] sm:$0xf]
        %v430 = vld [vmem:[%s428 + $0x4] sm:$0xf]
        %v431 = vld [vmem:[%s428 + $0x8] sm:$0xf]
        %v432 = vld [vmem:[%s428 + $0xc] sm:$0xf]
        %v433 = vld [vmem:[%s428 + $0x10] sm:$0xf]
        %v434 = vld [vmem:[%s428 + $0x14] sm:$0xf]
        %v435 = vld [vmem:[%s428 + $0x18] sm:$0xf]
        %v436 = vld [vmem:[%s428 + $0x1c] sm:$0xf]
        %v437 = vld [vmem:[%s428 + $0x20] sm:$0xf]
        %v438 = vld [vmem:[%s428 + $0x24] sm:$0xf]
        %v439 = vld [vmem:[%s428 + $0x28] sm:$0xf]
        %v440 = vld [vmem:[%s428 + $0x2c] sm:$0xf]
        %v441 = vld [vmem:[%s428 + $0x30] sm:$0xf]
        %v442 = vld [vmem:[%s428 + $0x34] sm:$0xf]
        %v443 = vld [vmem:[%s428 + $0x38] sm:$0xf]
        %v444 = vld [vmem:[%s428 + $0x3c] sm:$0xf]
        %s445 = scalar_lea.vmem %s1, 12
        %v446 = vld [vmem:[%s445] sm:$0xf]
        %v447 = vld [vmem:[%s445 + $0x4] sm:$0xf]
        %v448 = vld [vmem:[%s445 + $0x8] sm:$0x3]
        %v465 = vunpack.c.l.b16 %v429
        %v466 = vunpack.c.l.b16 %v430
        %v467 = vunpack.c.l.b16 %v431
        %v468 = vunpack.c.l.b16 %v432
        %v469 = vunpack.c.l.b16 %v433
        %v470 = vunpack.c.l.b16 %v434
        %v471 = vunpack.c.l.b16 %v435
        %v472 = vunpack.c.l.b16 %v436
        %v473 = vunpack.c.l.b16 %v437
        %v474 = vunpack.c.l.b16 %v438
        %v475 = vunpack.c.l.b16 %v439
        %v476 = vunpack.c.l.b16 %v440
        %v477 = vunpack.c.l.b16 %v441
        %v478 = vunpack.c.l.b16 %v442
        %v479 = vunpack.c.l.b16 %v443
        %v480 = vunpack.c.l.b16 %v444
        %v481 = vpack.c.b16 %v466, %v465
        %v482 = vpack.c.b16 %v468, %v467
        %v483 = vpack.c.b16 %v470, %v469
        %v484 = vpack.c.b16 %v472, %v471
        %v485 = vpack.c.b16 %v474, %v473
        %v486 = vpack.c.b16 %v476, %v475
        %v487 = vpack.c.b16 %v478, %v477
        %v488 = vpack.c.b16 %v480, %v479
        %v492 = vunpack.c.l.b16 %v446
        %v493 = vunpack.c.l.b16 %v447
        %v494 = vunpack.c.l.b16 %v448
        %v495 = vpack.c.b16 %v493, %v492
        %v496 = vpack.c.b16 %v494, %v494
        %v499 = vsel %vm283, %v481, 0
        %v502 = vsel %vm283, %v482, 0
        %v505 = vsel %vm283, %v483, 0
        %v508 = vsel %vm283, %v484, 0
        %v511 = vsel %vm283, %v485, 0
        %v514 = vsel %vm283, %v486, 0
        %v517 = vsel %vm283, %v487, 0
        %v520 = vsel %vm283, %v488, 0
        %v523 = vsel %vm308, %v496, 0
        %525 = vmatprep.subr.bf16.mxu0 0
        %526 = vmatpush1.bf16.msra.mxu0 %v495
        %527 = vmatprep.subr.bf16.mxu0 0
        %528 = vmatpush1.bf16.msra.mxu0 %v523
        %529 = vmatprep.subr.bf16.mxu0 0
        %530 = vmatpush1.bf16.msra.mxu0 0
        %531 = vmatprep.subr.bf16.mxu0 0
        %532 = vmatpush1.bf16.msra.mxu0 0
        %533 = vmatprep.subr.bf16.mxu0 0
        %534 = vmatpush1.bf16.msra.mxu0 0
        %535 = vmatprep.subr.bf16.mxu0 0
        %536 = vmatpush1.bf16.msra.mxu0 0
        %537 = vmatprep.subr.bf16.mxu0 0
        %538 = vmatpush1.bf16.msra.mxu0 0
        %539 = vmatprep.subr.bf16.mxu0 0
        %540 = vmatpush1.bf16.msra.mxu0 0
        %541 = vmatprep.subr.bf16.mxu0 0
        %542 = vmatpush1.bf16.msra.mxu0 0
        %543 = vmatprep.subr.bf16.mxu0 0
        %544 = vmatpush1.bf16.msra.mxu0 0
        %545 = vmatprep.subr.bf16.mxu0 0
        %546 = vmatpush1.bf16.msra.mxu0 0
        %547 = vmatprep.subr.bf16.mxu0 0
        %548 = vmatpush1.bf16.msra.mxu0 0
        %549 = vmatprep.subr.bf16.mxu0 0
        %550 = vmatpush1.bf16.msra.mxu0 0
        %551 = vmatprep.subr.bf16.mxu0 0
        %552 = vmatpush1.bf16.msra.mxu0 0
        %553 = vmatprep.subr.bf16.mxu0 0
        %554 = vmatpush1.bf16.msra.mxu0 0
        %555 = vmatprep.subr.bf16.mxu0 0
        %556 = vmatpush1.bf16.msra.mxu0 0
        %557 = vmatprep.mubr.bf16.mxu0 0
        %558 = vmatmul.mubr.bf16.gmra.mrb[0].mxu0 %v499
        %v559 = vpop.f32.mrb[0].mxu0
        %v560 = vadd.f32 0.0, %v559
        %v561 = vpop.f32.mrb[0].mxu0
        %v562 = vpop.f32.mrb[0].mxu0
        %v563 = vadd.f32 0.0, %v562
        %v564 = vpop.f32.mrb[0].mxu0
        %565 = vmatprep.mubr.bf16.mxu0 0
        %566 = vmatmul.mubr.bf16.gmra.mrb[0].mxu0 %v502
        %v567 = vpop.f32.mrb[0].mxu0
        %v568 = vadd.f32 0.0, %v567
        %v569 = vpop.f32.mrb[0].mxu0
        %v570 = vpop.f32.mrb[0].mxu0
        %v571 = vadd.f32 0.0, %v570
        %v572 = vpop.f32.mrb[0].mxu0
        %573 = vmatprep.mubr.bf16.mxu0 0
        %574 = vmatmul.mubr.bf16.gmra.mrb[0].mxu0 %v505
        %v575 = vpop.f32.mrb[0].mxu0
        %v576 = vadd.f32 0.0, %v575
        %v577 = vpop.f32.mrb[0].mxu0
        %v578 = vpop.f32.mrb[0].mxu0
        %v579 = vadd.f32 0.0, %v578
        %v580 = vpop.f32.mrb[0].mxu0
        %581 = vmatprep.mubr.bf16.mxu0 0
        %582 = vmatmul.mubr.bf16.gmra.mrb[0].mxu0 %v508
        %v583 = vpop.f32.mrb[0].mxu0
        %v584 = vadd.f32 0.0, %v583
        %v585 = vpop.f32.mrb[0].mxu0
        %v586 = vpop.f32.mrb[0].mxu0
        %v587 = vadd.f32 0.0, %v586
        %v588 = vpop.f32.mrb[0].mxu0
        %589 = vmatprep.mubr.bf16.mxu0 0
        %590 = vmatmul.mubr.bf16.gmra.mrb[0].mxu0 %v511
        %v591 = vpop.f32.mrb[0].mxu0
        %v592 = vadd.f32 0.0, %v591
        %v593 = vpop.f32.mrb[0].mxu0
        %v594 = vpop.f32.mrb[0].mxu0
        %v595 = vadd.f32 0.0, %v594
        %v596 = vpop.f32.mrb[0].mxu0
        %597 = vmatprep.mubr.bf16.mxu0 0
        %598 = vmatmul.mubr.bf16.gmra.mrb[0].mxu0 %v514
        %v599 = vpop.f32.mrb[0].mxu0
        %v600 = vadd.f32 0.0, %v599
        %v601 = vpop.f32.mrb[0].mxu0
        %v602 = vpop.f32.mrb[0].mxu0
        %v603 = vadd.f32 0.0, %v602
        %v604 = vpop.f32.mrb[0].mxu0
        %605 = vmatprep.mubr.bf16.mxu0 0
        %606 = vmatmul.mubr.bf16.gmra.mrb[0].mxu0 %v517
        %v607 = vpop.f32.mrb[0].mxu0
        %v608 = vadd.f32 0.0, %v607
        %v609 = vpop.f32.mrb[0].mxu0
        %v610 = vpop.f32.mrb[0].mxu0
        %v611 = vadd.f32 0.0, %v610
        %v612 = vpop.f32.mrb[0].mxu0
        %613 = vmatprep.mubr.bf16.mxu0 0
        %614 = vmatmul.mubr.bf16.gmra.mrb[0].mxu0 %v520
        %v615 = vpop.f32.mrb[0].mxu0
        %v616 = vadd.f32 0.0, %v615
        %v617 = vpop.f32.mrb[0].mxu0
        %v618 = vpop.f32.mrb[0].mxu0
        %v619 = vadd.f32 0.0, %v618
        %v620 = vpop.f32.mrb[0].mxu0
        %621 = vdwg.mxu0
        %v622 = vadd.f32 %v409, %v560
        %v623 = vadd.f32 %v410, %v563
        %v624 = vadd.f32 %v411, %v568
        %v625 = vadd.f32 %v412, %v571
        %v626 = vadd.f32 %v413, %v576
        %v627 = vadd.f32 %v414, %v579
        %v628 = vadd.f32 %v415, %v584
        %v629 = vadd.f32 %v416, %v587
        %v630 = vadd.f32 %v417, %v592
        %v631 = vadd.f32 %v418, %v595
        %v632 = vadd.f32 %v419, %v600
        %v633 = vadd.f32 %v420, %v603
        %v634 = vadd.f32 %v421, %v608
        %v635 = vadd.f32 %v422, %v611
        %v636 = vadd.f32 %v423, %v616
        %v637 = vadd.f32 %v424, %v619
        %s638 = sadd.s32 %s204, 2
        %s639 = smul.u32 %s638, 2
        %s640 = smul.addr %s639, 4
        %s641 = scalar_lea.vmem %s180, %s640 [#allocation2]
        %v642 = vld [vmem:[%s641] sm:$0xf]
        %v643 = vld [vmem:[%s641 + $0x4] sm:$0xf]
        %v644 = vld [vmem:[%s641 + $0x8] sm:$0xf]
        %v645 = vld [vmem:[%s641 + $0xc] sm:$0xf]
        %v646 = vld [vmem:[%s641 + $0x10] sm:$0xf]
        %v647 = vld [vmem:[%s641 + $0x14] sm:$0xf]
        %v648 = vld [vmem:[%s641 + $0x18] sm:$0xf]
        %v649 = vld [vmem:[%s641 + $0x1c] sm:$0xf]
        %v650 = vld [vmem:[%s641 + $0x20] sm:$0xf]
        %v651 = vld [vmem:[%s641 + $0x24] sm:$0xf]
        %v652 = vld [vmem:[%s641 + $0x28] sm:$0xf]
        %v653 = vld [vmem:[%s641 + $0x2c] sm:$0xf]
        %v654 = vld [vmem:[%s641 + $0x30] sm:$0xf]
        %v655 = vld [vmem:[%s641 + $0x34] sm:$0xf]
        %v656 = vld [vmem:[%s641 + $0x38] sm:$0xf]
        %v657 = vld [vmem:[%s641 + $0x3c] sm:$0xf]
        %s658 = scalar_lea.vmem %s1, 24
        %v659 = vld [vmem:[%s658] sm:$0xf]
        %v660 = vld [vmem:[%s658 + $0x4] sm:$0xf]
        %v661 = vld [vmem:[%s658 + $0x8] sm:$0x3]
        %v678 = vunpack.c.l.b16 %v642
        %v679 = vunpack.c.l.b16 %v643
        %v680 = vunpack.c.l.b16 %v644
        %v681 = vunpack.c.l.b16 %v645
        %v682 = vunpack.c.l.b16 %v646
        %v683 = vunpack.c.l.b16 %v647
        %v684 = vunpack.c.l.b16 %v648
        %v685 = vunpack.c.l.b16 %v649
        %v686 = vunpack.c.l.b16 %v650
        %v687 = vunpack.c.l.b16 %v651
        %v688 = vunpack.c.l.b16 %v652
        %v689 = vunpack.c.l.b16 %v653
        %v690 = vunpack.c.l.b16 %v654
        %v691 = vunpack.c.l.b16 %v655
        %v692 = vunpack.c.l.b16 %v656
        %v693 = vunpack.c.l.b16 %v657
        %v694 = vpack.c.b16 %v679, %v678
        %v695 = vpack.c.b16 %v681, %v680
        %v696 = vpack.c.b16 %v683, %v682
        %v697 = vpack.c.b16 %v685, %v684
        %v698 = vpack.c.b16 %v687, %v686
        %v699 = vpack.c.b16 %v689, %v688
        %v700 = vpack.c.b16 %v691, %v690
        %v701 = vpack.c.b16 %v693, %v692
        %v705 = vunpack.c.l.b16 %v659
        %v706 = vunpack.c.l.b16 %v660
        %v707 = vunpack.c.l.b16 %v661
        %v708 = vpack.c.b16 %v706, %v705
        %v709 = vpack.c.b16 %v707, %v707
        %v712 = vsel %vm283, %v694, 0
        %v715 = vsel %vm283, %v695, 0
        %v718 = vsel %vm283, %v696, 0
        %v721 = vsel %vm283, %v697, 0
        %v724 = vsel %vm283, %v698, 0
        %v727 = vsel %vm283, %v699, 0
        %v730 = vsel %vm283, %v700, 0
        %v733 = vsel %vm283, %v701, 0
        %v736 = vsel %vm308, %v709, 0
        %738 = vmatprep.subr.bf16.mxu0 0
        %739 = vmatpush1.bf16.msra.mxu0 %v708
        %740 = vmatprep.subr.bf16.mxu0 0
        %741 = vmatpush1.bf16.msra.mxu0 %v736
        %742 = vmatprep.subr.bf16.mxu0 0
        %743 = vmatpush1.bf16.msra.mxu0 0
        %744 = vmatprep.subr.bf16.mxu0 0
        %745 = vmatpush1.bf16.msra.mxu0 0
        %746 = vmatprep.subr.bf16.mxu0 0
        %747 = vmatpush1.bf16.msra.mxu0 0
        %748 = vmatprep.subr.bf16.mxu0 0
        %749 = vmatpush1.bf16.msra.mxu0 0
        %750 = vmatprep.subr.bf16.mxu0 0
        %751 = vmatpush1.bf16.msra.mxu0 0
        %752 = vmatprep.subr.bf16.mxu0 0
        %753 = vmatpush1.bf16.msra.mxu0 0
        %754 = vmatprep.subr.bf16.mxu0 0
        %755 = vmatpush1.bf16.msra.mxu0 0
        %756 = vmatprep.subr.bf16.mxu0 0
        %757 = vmatpush1.bf16.msra.mxu0 0
        %758 = vmatprep.subr.bf16.mxu0 0
        %759 = vmatpush1.bf16.msra.mxu0 0
        %760 = vmatprep.subr.bf16.mxu0 0
        %761 = vmatpush1.bf16.msra.mxu0 0
        %762 = vmatprep.subr.bf16.mxu0 0
        %763 = vmatpush1.bf16.msra.mxu0 0
        %764 = vmatprep.subr.bf16.mxu0 0
        %765 = vmatpush1.bf16.msra.mxu0 0
        %766 = vmatprep.subr.bf16.mxu0 0
        %767 = vmatpush1.bf16.msra.mxu0 0
        %768 = vmatprep.subr.bf16.mxu0 0
        %769 = vmatpush1.bf16.msra.mxu0 0
        %770 = vmatprep.mubr.bf16.mxu0 0
        %771 = vmatmul.mubr.bf16.gmra.mrb[0].mxu0 %v712
        %v772 = vpop.f32.mrb[0].mxu0
        %v773 = vadd.f32 0.0, %v772
        %v774 = vpop.f32.mrb[0].mxu0
        %v775 = vpop.f32.mrb[0].mxu0
        %v776 = vadd.f32 0.0, %v775
        %v777 = vpop.f32.mrb[0].mxu0
        %778 = vmatprep.mubr.bf16.mxu0 0
        %779 = vmatmul.mubr.bf16.gmra.mrb[0].mxu0 %v715
        %v780 = vpop.f32.mrb[0].mxu0
        %v781 = vadd.f32 0.0, %v780
        %v782 = vpop.f32.mrb[0].mxu0
        %v783 = vpop.f32.mrb[0].mxu0
        %v784 = vadd.f32 0.0, %v783
        %v785 = vpop.f32.mrb[0].mxu0
        %786 = vmatprep.mubr.bf16.mxu0 0
        %787 = vmatmul.mubr.bf16.gmra.mrb[0].mxu0 %v718
        %v788 = vpop.f32.mrb[0].mxu0
        %v789 = vadd.f32 0.0, %v788
        %v790 = vpop.f32.mrb[0].mxu0
        %v791 = vpop.f32.mrb[0].mxu0
        %v792 = vadd.f32 0.0, %v791
        %v793 = vpop.f32.mrb[0].mxu0
        %794 = vmatprep.mubr.bf16.mxu0 0
        %795 = vmatmul.mubr.bf16.gmra.mrb[0].mxu0 %v721
        %v796 = vpop.f32.mrb[0].mxu0
        %v797 = vadd.f32 0.0, %v796
        %v798 = vpop.f32.mrb[0].mxu0
        %v799 = vpop.f32.mrb[0].mxu0
        %v800 = vadd.f32 0.0, %v799
        %v801 = vpop.f32.mrb[0].mxu0
        %802 = vmatprep.mubr.bf16.mxu0 0
        %803 = vmatmul.mubr.bf16.gmra.mrb[0].mxu0 %v724
        %v804 = vpop.f32.mrb[0].mxu0
        %v805 = vadd.f32 0.0, %v804
        %v806 = vpop.f32.mrb[0].mxu0
        %v807 = vpop.f32.mrb[0].mxu0
        %v808 = vadd.f32 0.0, %v807
        %v809 = vpop.f32.mrb[0].mxu0
        %810 = vmatprep.mubr.bf16.mxu0 0
        %811 = vmatmul.mubr.bf16.gmra.mrb[0].mxu0 %v727
        %v812 = vpop.f32.mrb[0].mxu0
        %v813 = vadd.f32 0.0, %v812
        %v814 = vpop.f32.mrb[0].mxu0
        %v815 = vpop.f32.mrb[0].mxu0
        %v816 = vadd.f32 0.0, %v815
        %v817 = vpop.f32.mrb[0].mxu0
        %818 = vmatprep.mubr.bf16.mxu0 0
        %819 = vmatmul.mubr.bf16.gmra.mrb[0].mxu0 %v730
        %v820 = vpop.f32.mrb[0].mxu0
        %v821 = vadd.f32 0.0, %v820
        %v822 = vpop.f32.mrb[0].mxu0
        %v823 = vpop.f32.mrb[0].mxu0
        %v824 = vadd.f32 0.0, %v823
        %v825 = vpop.f32.mrb[0].mxu0
        %826 = vmatprep.mubr.bf16.mxu0 0
        %827 = vmatmul.mubr.bf16.gmra.mrb[0].mxu0 %v733
        %v828 = vpop.f32.mrb[0].mxu0
        %v829 = vadd.f32 0.0, %v828
        %v830 = vpop.f32.mrb[0].mxu0
        %v831 = vpop.f32.mrb[0].mxu0
        %v832 = vadd.f32 0.0, %v831
        %v833 = vpop.f32.mrb[0].mxu0
        %834 = vdwg.mxu0
        %v835 = vadd.f32 %v622, %v773
        %v836 = vadd.f32 %v623, %v776
        %v837 = vadd.f32 %v624, %v781
        %v838 = vadd.f32 %v625, %v784
        %v839 = vadd.f32 %v626, %v789
        %v840 = vadd.f32 %v627, %v792
        %v841 = vadd.f32 %v628, %v797
        %v842 = vadd.f32 %v629, %v800
        %v843 = vadd.f32 %v630, %v805
        %v844 = vadd.f32 %v631, %v808
        %v845 = vadd.f32 %v632, %v813
        %v846 = vadd.f32 %v633, %v816
        %v847 = vadd.f32 %v634, %v821
        %v848 = vadd.f32 %v635, %v824
        %v849 = vadd.f32 %v636, %v829
        %v850 = vadd.f32 %v637, %v832
        %s851 = sadd.s32 %s204, 3
        %s852 = smul.u32 %s851, 2
        %s853 = smul.addr %s852, 4
        %s854 = scalar_lea.vmem %s180, %s853 [#allocation2]
        %v855 = vld [vmem:[%s854] sm:$0xf]
        %v856 = vld [vmem:[%s854 + $0x4] sm:$0xf]
        %v857 = vld [vmem:[%s854 + $0x8] sm:$0xf]
        %v858 = vld [vmem:[%s854 + $0xc] sm:$0xf]
        %v859 = vld [vmem:[%s854 + $0x10] sm:$0xf]
        %v860 = vld [vmem:[%s854 + $0x14] sm:$0xf]
        %v861 = vld [vmem:[%s854 + $0x18] sm:$0xf]
        %v862 = vld [vmem:[%s854 + $0x1c] sm:$0xf]
        %v863 = vld [vmem:[%s854 + $0x20] sm:$0xf]
        %v864 = vld [vmem:[%s854 + $0x24] sm:$0xf]
        %v865 = vld [vmem:[%s854 + $0x28] sm:$0xf]
        %v866 = vld [vmem:[%s854 + $0x2c] sm:$0xf]
        %v867 = vld [vmem:[%s854 + $0x30] sm:$0xf]
        %v868 = vld [vmem:[%s854 + $0x34] sm:$0xf]
        %v869 = vld [vmem:[%s854 + $0x38] sm:$0xf]
        %v870 = vld [vmem:[%s854 + $0x3c] sm:$0xf]
        %s871 = scalar_lea.vmem %s1, 36
        %v872 = vld [vmem:[%s871] sm:$0xf]
        %v873 = vld [vmem:[%s871 + $0x4] sm:$0xf]
        %v874 = vld [vmem:[%s871 + $0x8] sm:$0x3]
        %v891 = vunpack.c.l.b16 %v855
        %v892 = vunpack.c.l.b16 %v856
        %v893 = vunpack.c.l.b16 %v857
        %v894 = vunpack.c.l.b16 %v858
        %v895 = vunpack.c.l.b16 %v859
        %v896 = vunpack.c.l.b16 %v860
        %v897 = vunpack.c.l.b16 %v861
        %v898 = vunpack.c.l.b16 %v862
        %v899 = vunpack.c.l.b16 %v863
        %v900 = vunpack.c.l.b16 %v864
        %v901 = vunpack.c.l.b16 %v865
        %v902 = vunpack.c.l.b16 %v866
        %v903 = vunpack.c.l.b16 %v867
        %v904 = vunpack.c.l.b16 %v868
        %v905 = vunpack.c.l.b16 %v869
        %v906 = vunpack.c.l.b16 %v870
        %v907 = vpack.c.b16 %v892, %v891
        %v908 = vpack.c.b16 %v894, %v893
        %v909 = vpack.c.b16 %v896, %v895
        %v910 = vpack.c.b16 %v898, %v897
        %v911 = vpack.c.b16 %v900, %v899
        %v912 = vpack.c.b16 %v902, %v901
        %v913 = vpack.c.b16 %v904, %v903
        %v914 = vpack.c.b16 %v906, %v905
        %v918 = vunpack.c.l.b16 %v872
        %v919 = vunpack.c.l.b16 %v873
        %v920 = vunpack.c.l.b16 %v874
        %v921 = vpack.c.b16 %v919, %v918
        %v922 = vpack.c.b16 %v920, %v920
        %v925 = vsel %vm283, %v907, 0
        %v928 = vsel %vm283, %v908, 0
        %v931 = vsel %vm283, %v909, 0
        %v934 = vsel %vm283, %v910, 0
        %v937 = vsel %vm283, %v911, 0
        %v940 = vsel %vm283, %v912, 0
        %v943 = vsel %vm283, %v913, 0
        %v946 = vsel %vm283, %v914, 0
        %v949 = vsel %vm308, %v922, 0
        %951 = vmatprep.subr.bf16.mxu0 0
        %952 = vmatpush1.bf16.msra.mxu0 %v921
        %953 = vmatprep.subr.bf16.mxu0 0
        %954 = vmatpush1.bf16.msra.mxu0 %v949
        %955 = vmatprep.subr.bf16.mxu0 0
        %956 = vmatpush1.bf16.msra.mxu0 0
        %957 = vmatprep.subr.bf16.mxu0 0
        %958 = vmatpush1.bf16.msra.mxu0 0
        %959 = vmatprep.subr.bf16.mxu0 0
        %960 = vmatpush1.bf16.msra.mxu0 0
        %961 = vmatprep.subr.bf16.mxu0 0
        %962 = vmatpush1.bf16.msra.mxu0 0
        %963 = vmatprep.subr.bf16.mxu0 0
        %964 = vmatpush1.bf16.msra.mxu0 0
        %965 = vmatprep.subr.bf16.mxu0 0
        %966 = vmatpush1.bf16.msra.mxu0 0
        %967 = vmatprep.subr.bf16.mxu0 0
        %968 = vmatpush1.bf16.msra.mxu0 0
        %969 = vmatprep.subr.bf16.mxu0 0
        %970 = vmatpush1.bf16.msra.mxu0 0
        %971 = vmatprep.subr.bf16.mxu0 0
        %972 = vmatpush1.bf16.msra.mxu0 0
        %973 = vmatprep.subr.bf16.mxu0 0
        %974 = vmatpush1.bf16.msra.mxu0 0
        %975 = vmatprep.subr.bf16.mxu0 0
        %976 = vmatpush1.bf16.msra.mxu0 0
        %977 = vmatprep.subr.bf16.mxu0 0
        %978 = vmatpush1.bf16.msra.mxu0 0
        %979 = vmatprep.subr.bf16.mxu0 0
        %980 = vmatpush1.bf16.msra.mxu0 0
        %981 = vmatprep.subr.bf16.mxu0 0
        %982 = vmatpush1.bf16.msra.mxu0 0
        %983 = vmatprep.mubr.bf16.mxu0 0
        %984 = vmatmul.mubr.bf16.gmra.mrb[0].mxu0 %v925
        %v985 = vpop.f32.mrb[0].mxu0
        %v986 = vadd.f32 0.0, %v985
        %v987 = vpop.f32.mrb[0].mxu0
        %v988 = vpop.f32.mrb[0].mxu0
        %v989 = vadd.f32 0.0, %v988
        %v990 = vpop.f32.mrb[0].mxu0
        %991 = vmatprep.mubr.bf16.mxu0 0
        %992 = vmatmul.mubr.bf16.gmra.mrb[0].mxu0 %v928
        %v993 = vpop.f32.mrb[0].mxu0
        %v994 = vadd.f32 0.0, %v993
        %v995 = vpop.f32.mrb[0].mxu0
        %v996 = vpop.f32.mrb[0].mxu0
        %v997 = vadd.f32 0.0, %v996
        %v998 = vpop.f32.mrb[0].mxu0
        %999 = vmatprep.mubr.bf16.mxu0 0
        %1000 = vmatmul.mubr.bf16.gmra.mrb[0].mxu0 %v931
        %v1001 = vpop.f32.mrb[0].mxu0
        %v1002 = vadd.f32 0.0, %v1001
        %v1003 = vpop.f32.mrb[0].mxu0
        %v1004 = vpop.f32.mrb[0].mxu0
        %v1005 = vadd.f32 0.0, %v1004
        %v1006 = vpop.f32.mrb[0].mxu0
        %1007 = vmatprep.mubr.bf16.mxu0 0
        %1008 = vmatmul.mubr.bf16.gmra.mrb[0].mxu0 %v934
        %v1009 = vpop.f32.mrb[0].mxu0
        %v1010 = vadd.f32 0.0, %v1009
        %v1011 = vpop.f32.mrb[0].mxu0
        %v1012 = vpop.f32.mrb[0].mxu0
        %v1013 = vadd.f32 0.0, %v1012
        %v1014 = vpop.f32.mrb[0].mxu0
        %1015 = vmatprep.mubr.bf16.mxu0 0
        %1016 = vmatmul.mubr.bf16.gmra.mrb[0].mxu0 %v937
        %v1017 = vpop.f32.mrb[0].mxu0
        %v1018 = vadd.f32 0.0, %v1017
        %v1019 = vpop.f32.mrb[0].mxu0
        %v1020 = vpop.f32.mrb[0].mxu0
        %v1021 = vadd.f32 0.0, %v1020
        %v1022 = vpop.f32.mrb[0].mxu0
        %1023 = vmatprep.mubr.bf16.mxu0 0
        %1024 = vmatmul.mubr.bf16.gmra.mrb[0].mxu0 %v940
        %v1025 = vpop.f32.mrb[0].mxu0
        %v1026 = vadd.f32 0.0, %v1025
        %v1027 = vpop.f32.mrb[0].mxu0
        %v1028 = vpop.f32.mrb[0].mxu0
        %v1029 = vadd.f32 0.0, %v1028
        %v1030 = vpop.f32.mrb[0].mxu0
        %1031 = vmatprep.mubr.bf16.mxu0 0
        %1032 = vmatmul.mubr.bf16.gmra.mrb[0].mxu0 %v943
        %v1033 = vpop.f32.mrb[0].mxu0
        %v1034 = vadd.f32 0.0, %v1033
        %v1035 = vpop.f32.mrb[0].mxu0
        %v1036 = vpop.f32.mrb[0].mxu0
        %v1037 = vadd.f32 0.0, %v1036
        %v1038 = vpop.f32.mrb[0].mxu0
        %1039 = vmatprep.mubr.bf16.mxu0 0
        %1040 = vmatmul.mubr.bf16.gmra.mrb[0].mxu0 %v946
        %v1041 = vpop.f32.mrb[0].mxu0
        %v1042 = vadd.f32 0.0, %v1041
        %v1043 = vpop.f32.mrb[0].mxu0
        %v1044 = vpop.f32.mrb[0].mxu0
        %v1045 = vadd.f32 0.0, %v1044
        %v1046 = vpop.f32.mrb[0].mxu0
        %1047 = vdwg.mxu0
        %v1048 = vadd.f32 %v835, %v986
        %v1049 = vadd.f32 %v836, %v989
        %v1050 = vadd.f32 %v837, %v994
        %v1051 = vadd.f32 %v838, %v997
        %v1052 = vadd.f32 %v839, %v1002
        %v1053 = vadd.f32 %v840, %v1005
        %v1054 = vadd.f32 %v841, %v1010
        %v1055 = vadd.f32 %v842, %v1013
        %v1056 = vadd.f32 %v843, %v1018
        %v1057 = vadd.f32 %v844, %v1021
        %v1058 = vadd.f32 %v845, %v1026
        %v1059 = vadd.f32 %v846, %v1029
        %v1060 = vadd.f32 %v847, %v1034
        %v1061 = vadd.f32 %v848, %v1037
        %v1062 = vadd.f32 %v849, %v1042
        %v1063 = vadd.f32 %v850, %v1045
        %s1064 = sadd.s32 %s204, 4
        %s1065 = smul.u32 %s1064, 2
        %s1066 = smul.addr %s1065, 4
        %s1067 = scalar_lea.vmem %s180, %s1066 [#allocation2]
        %v1068 = vld [vmem:[%s1067] sm:$0xf]
        %v1069 = vld [vmem:[%s1067 + $0x4] sm:$0xf]
        %v1070 = vld [vmem:[%s1067 + $0x8] sm:$0xf]
        %v1071 = vld [vmem:[%s1067 + $0xc] sm:$0xf]
        %v1072 = vld [vmem:[%s1067 + $0x10] sm:$0xf]
        %v1073 = vld [vmem:[%s1067 + $0x14] sm:$0xf]
        %v1074 = vld [vmem:[%s1067 + $0x18] sm:$0xf]
        %v1075 = vld [vmem:[%s1067 + $0x1c] sm:$0xf]
        %v1076 = vld [vmem:[%s1067 + $0x20] sm:$0xf]
        %v1077 = vld [vmem:[%s1067 + $0x24] sm:$0xf]
        %v1078 = vld [vmem:[%s1067 + $0x28] sm:$0xf]
        %v1079 = vld [vmem:[%s1067 + $0x2c] sm:$0xf]
        %v1080 = vld [vmem:[%s1067 + $0x30] sm:$0xf]
        %v1081 = vld [vmem:[%s1067 + $0x34] sm:$0xf]
        %v1082 = vld [vmem:[%s1067 + $0x38] sm:$0xf]
        %v1083 = vld [vmem:[%s1067 + $0x3c] sm:$0xf]
        %s1084 = scalar_lea.vmem %s1, 48
        %v1085 = vld [vmem:[%s1084] sm:$0xf]
        %v1086 = vld [vmem:[%s1084 + $0x4] sm:$0xf]
        %v1087 = vld [vmem:[%s1084 + $0x8] sm:$0x3]
        %v1104 = vunpack.c.l.b16 %v1068
        %v1105 = vunpack.c.l.b16 %v1069
        %v1106 = vunpack.c.l.b16 %v1070
        %v1107 = vunpack.c.l.b16 %v1071
        %v1108 = vunpack.c.l.b16 %v1072
        %v1109 = vunpack.c.l.b16 %v1073
        %v1110 = vunpack.c.l.b16 %v1074
        %v1111 = vunpack.c.l.b16 %v1075
        %v1112 = vunpack.c.l.b16 %v1076
        %v1113 = vunpack.c.l.b16 %v1077
        %v1114 = vunpack.c.l.b16 %v1078
        %v1115 = vunpack.c.l.b16 %v1079
        %v1116 = vunpack.c.l.b16 %v1080
        %v1117 = vunpack.c.l.b16 %v1081
        %v1118 = vunpack.c.l.b16 %v1082
        %v1119 = vunpack.c.l.b16 %v1083
        %v1120 = vpack.c.b16 %v1105, %v1104
        %v1121 = vpack.c.b16 %v1107, %v1106
        %v1122 = vpack.c.b16 %v1109, %v1108
        %v1123 = vpack.c.b16 %v1111, %v1110
        %v1124 = vpack.c.b16 %v1113, %v1112
        %v1125 = vpack.c.b16 %v1115, %v1114
        %v1126 = vpack.c.b16 %v1117, %v1116
        %v1127 = vpack.c.b16 %v1119, %v1118
        %v1131 = vunpack.c.l.b16 %v1085
        %v1132 = vunpack.c.l.b16 %v1086
        %v1133 = vunpack.c.l.b16 %v1087
        %v1134 = vpack.c.b16 %v1132, %v1131
        %v1135 = vpack.c.b16 %v1133, %v1133
        %v1138 = vsel %vm283, %v1120, 0
        %v1141 = vsel %vm283, %v1121, 0
        %v1144 = vsel %vm283, %v1122, 0
        %v1147 = vsel %vm283, %v1123, 0
        %v1150 = vsel %vm283, %v1124, 0
        %v1153 = vsel %vm283, %v1125, 0
        %v1156 = vsel %vm283, %v1126, 0
        %v1159 = vsel %vm283, %v1127, 0
        %v1162 = vsel %vm308, %v1135, 0
        %1164 = vmatprep.subr.bf16.mxu0 0
        %1165 = vmatpush1.bf16.msra.mxu0 %v1134
        %1166 = vmatprep.subr.bf16.mxu0 0
        %1167 = vmatpush1.bf16.msra.mxu0 %v1162
        %1168 = vmatprep.subr.bf16.mxu0 0
        %1169 = vmatpush1.bf16.msra.mxu0 0
        %1170 = vmatprep.subr.bf16.mxu0 0
        %1171 = vmatpush1.bf16.msra.mxu0 0
        %1172 = vmatprep.subr.bf16.mxu0 0
        %1173 = vmatpush1.bf16.msra.mxu0 0
        %1174 = vmatprep.subr.bf16.mxu0 0
        %1175 = vmatpush1.bf16.msra.mxu0 0
        %1176 = vmatprep.subr.bf16.mxu0 0
        %1177 = vmatpush1.bf16.msra.mxu0 0
        %1178 = vmatprep.subr.bf16.mxu0 0
        %1179 = vmatpush1.bf16.msra.mxu0 0
        %1180 = vmatprep.subr.bf16.mxu0 0
        %1181 = vmatpush1.bf16.msra.mxu0 0
        %1182 = vmatprep.subr.bf16.mxu0 0
        %1183 = vmatpush1.bf16.msra.mxu0 0
        %1184 = vmatprep.subr.bf16.mxu0 0
        %1185 = vmatpush1.bf16.msra.mxu0 0
        %1186 = vmatprep.subr.bf16.mxu0 0
        %1187 = vmatpush1.bf16.msra.mxu0 0
        %1188 = vmatprep.subr.bf16.mxu0 0
        %1189 = vmatpush1.bf16.msra.mxu0 0
        %1190 = vmatprep.subr.bf16.mxu0 0
        %1191 = vmatpush1.bf16.msra.mxu0 0
        %1192 = vmatprep.subr.bf16.mxu0 0
        %1193 = vmatpush1.bf16.msra.mxu0 0
        %1194 = vmatprep.subr.bf16.mxu0 0
        %1195 = vmatpush1.bf16.msra.mxu0 0
        %1196 = vmatprep.mubr.bf16.mxu0 0
        %1197 = vmatmul.mubr.bf16.gmra.mrb[0].mxu0 %v1138
        %v1198 = vpop.f32.mrb[0].mxu0
        %v1199 = vadd.f32 0.0, %v1198
        %v1200 = vpop.f32.mrb[0].mxu0
        %v1201 = vpop.f32.mrb[0].mxu0
        %v1202 = vadd.f32 0.0, %v1201
        %v1203 = vpop.f32.mrb[0].mxu0
        %1204 = vmatprep.mubr.bf16.mxu0 0
        %1205 = vmatmul.mubr.bf16.gmra.mrb[0].mxu0 %v1141
        %v1206 = vpop.f32.mrb[0].mxu0
        %v1207 = vadd.f32 0.0, %v1206
        %v1208 = vpop.f32.mrb[0].mxu0
        %v1209 = vpop.f32.mrb[0].mxu0
        %v1210 = vadd.f32 0.0, %v1209
        %v1211 = vpop.f32.mrb[0].mxu0
        %1212 = vmatprep.mubr.bf16.mxu0 0
        %1213 = vmatmul.mubr.bf16.gmra.mrb[0].mxu0 %v1144
        %v1214 = vpop.f32.mrb[0].mxu0
        %v1215 = vadd.f32 0.0, %v1214
        %v1216 = vpop.f32.mrb[0].mxu0
        %v1217 = vpop.f32.mrb[0].mxu0
        %v1218 = vadd.f32 0.0, %v1217
        %v1219 = vpop.f32.mrb[0].mxu0
        %1220 = vmatprep.mubr.bf16.mxu0 0
        %1221 = vmatmul.mubr.bf16.gmra.mrb[0].mxu0 %v1147
        %v1222 = vpop.f32.mrb[0].mxu0
        %v1223 = vadd.f32 0.0, %v1222
        %v1224 = vpop.f32.mrb[0].mxu0
        %v1225 = vpop.f32.mrb[0].mxu0
        %v1226 = vadd.f32 0.0, %v1225
        %v1227 = vpop.f32.mrb[0].mxu0
        %1228 = vmatprep.mubr.bf16.mxu0 0
        %1229 = vmatmul.mubr.bf16.gmra.mrb[0].mxu0 %v1150
        %v1230 = vpop.f32.mrb[0].mxu0
        %v1231 = vadd.f32 0.0, %v1230
        %v1232 = vpop.f32.mrb[0].mxu0
        %v1233 = vpop.f32.mrb[0].mxu0
        %v1234 = vadd.f32 0.0, %v1233
        %v1235 = vpop.f32.mrb[0].mxu0
        %1236 = vmatprep.mubr.bf16.mxu0 0
        %1237 = vmatmul.mubr.bf16.gmra.mrb[0].mxu0 %v1153
        %v1238 = vpop.f32.mrb[0].mxu0
        %v1239 = vadd.f32 0.0, %v1238
        %v1240 = vpop.f32.mrb[0].mxu0
        %v1241 = vpop.f32.mrb[0].mxu0
        %v1242 = vadd.f32 0.0, %v1241
        %v1243 = vpop.f32.mrb[0].mxu0
        %1244 = vmatprep.mubr.bf16.mxu0 0
        %1245 = vmatmul.mubr.bf16.gmra.mrb[0].mxu0 %v1156
        %v1246 = vpop.f32.mrb[0].mxu0
        %v1247 = vadd.f32 0.0, %v1246
        %v1248 = vpop.f32.mrb[0].mxu0
        %v1249 = vpop.f32.mrb[0].mxu0
        %v1250 = vadd.f32 0.0, %v1249
        %v1251 = vpop.f32.mrb[0].mxu0
        %1252 = vmatprep.mubr.bf16.mxu0 0
        %1253 = vmatmul.mubr.bf16.gmra.mrb[0].mxu0 %v1159
        %v1254 = vpop.f32.mrb[0].mxu0
        %v1255 = vadd.f32 0.0, %v1254
        %v1256 = vpop.f32.mrb[0].mxu0
        %v1257 = vpop.f32.mrb[0].mxu0
        %v1258 = vadd.f32 0.0, %v1257
        %v1259 = vpop.f32.mrb[0].mxu0
        %1260 = vdwg.mxu0
        %v1261 = vadd.f32 %v1048, %v1199
        %v1262 = vadd.f32 %v1049, %v1202
        %v1263 = vadd.f32 %v1050, %v1207
        %v1264 = vadd.f32 %v1051, %v1210
        %v1265 = vadd.f32 %v1052, %v1215
        %v1266 = vadd.f32 %v1053, %v1218
        %v1267 = vadd.f32 %v1054, %v1223
        %v1268 = vadd.f32 %v1055, %v1226
        %v1269 = vadd.f32 %v1056, %v1231
        %v1270 = vadd.f32 %v1057, %v1234
        %v1271 = vadd.f32 %v1058, %v1239
        %v1272 = vadd.f32 %v1059, %v1242
        %v1273 = vadd.f32 %v1060, %v1247
        %v1274 = vadd.f32 %v1061, %v1250
        %v1275 = vadd.f32 %v1062, %v1255
        %v1276 = vadd.f32 %v1063, %v1258
        %1277 = vxpose.xlu0.b32.start [1/16] %v1261, 128
        %1278 = vxpose.xlu0.b32.cont [2/16] %v1262, 128
        %1279 = vxpose.xlu0.b32.cont [3/16] %v1263, 128
        %1280 = vxpose.xlu0.b32.cont [4/16] %v1264, 128
        %1281 = vxpose.xlu0.b32.cont [5/16] %v1265, 128
        %1282 = vxpose.xlu0.b32.cont [6/16] %v1266, 128
        %1283 = vxpose.xlu0.b32.cont [7/16] %v1267, 128
        %1284 = vxpose.xlu0.b32.cont [8/16] %v1268, 128
        %1285 = vxpose.xlu0.b32.cont [9/16] %v1269, 128
        %1286 = vxpose.xlu0.b32.cont [10/16] %v1270, 128
        %1287 = vxpose.xlu0.b32.cont [11/16] %v1271, 128
        %1288 = vxpose.xlu0.b32.cont [12/16] %v1272, 128
        %1289 = vxpose.xlu0.b32.cont [13/16] %v1273, 128
        %1290 = vxpose.xlu0.b32.cont [14/16] %v1274, 128
        %1291 = vxpose.xlu0.b32.cont [15/16] %v1275, 128
        %1292 = vxpose.xlu0.b32.end [16/16] %v1276, 128
        %v1293 = vpop.trf.xlu0
        %v1294 = vpop.trf.xlu0
        %v1295 = vpop.trf.xlu0
        %v1296 = vpop.trf.xlu0
        %v1297 = vpop.trf.xlu0
        %v1298 = vpop.trf.xlu0
        %v1299 = vpop.trf.xlu0
        %v1300 = vpop.trf.xlu0
        %v1301 = vpop.trf.xlu0
        %v1302 = vpop.trf.xlu0
        %v1303 = vpop.trf.xlu0
        %v1304 = vpop.trf.xlu0
        %v1305 = vpop.trf.xlu0
        %v1306 = vpop.trf.xlu0
        %v1307 = vpop.trf.xlu0
        %v1308 = vpop.trf.xlu0
        %1309 = vst [vmem:[%s202] sm:$0xff] %v1293
        %s1310 = sand.u32 %s110, 1
        %s1311 = scalar_lea.sflag [#allocation4], %s1310
        %s1312 = sand.u32 %s110, 1
        %s1313 = smul.addr %s1312, 8
        %s1314 = scalar_lea.vmem [#allocation5], %s1313
        // Predicated region
        $region37: #{tpu_custom_call.1} parent=31 // pred_check
          %p1315 = pneg %p120
        $region38: #{tpu_custom_call.1} parent=31 // pred_check_branch
          %1317 = sbr.rel (%p1315) target = $region40
        $region39: #{tpu_custom_call.1} parent=31 // pred_region
          %s1319 = ssub.s32 128, 128
          %1320 = vsyncadd %s1311, %s1319
          %s1321 = smul.addr %s24, 2
          %s1322 = sadd.s32 %s25, %s1321
          %s1323 = smul.addr %s1322, 128
          %s1324 = scalar_lea.hbm %s3, %s1323
          %s1326 = sshll.u32 %s1314, 4
          %s1327 = int_to_ptr.vmem [resolvable:$true] %s1326
          %1329 = dma.vmem_to_hbm [thread:$0]  %s1327, 128, %s1324, %s1311
        $region40: #{tpu_custom_call.1} parent=31 // pred_fallthru
          _
      $region32: #{tpu_custom_call.1} parent=5 // pred_fallthru
        _
      %p1330 = scmp.le.s32.totalorder 2, %s15
      // Predicated region
      $region41: #{tpu_custom_call.1} parent=5 // pred_check
        %p1331 = pneg %p1330
      $region42: #{tpu_custom_call.1} parent=5 // pred_check_branch
        %1333 = sbr.rel (%p1331) target = $region44
      $region43: #{tpu_custom_call.1} parent=5 // pred_region
        %s1334 = ssub.s32 %s15, 2
        // Predicated region
        $region45: #{tpu_custom_call.1} parent=43 // pred_check
          %p1335 = pneg %p126
        $region46: #{tpu_custom_call.1} parent=43 // pred_check_branch
          %1337 = sbr.rel (%p1335) target = $region48
        $region47: #{tpu_custom_call.1} parent=43 // pred_region
          %s1338 = sand.u32 %s111, 1
          %s1339 = scalar_lea.sflag [#allocation4], %s1338
          %s1340 = sand.u32 %s111, 1
          %s1341 = smul.addr %s1340, 8
          %s1342 = scalar_lea.vmem [#allocation5], %s1341
          %1343 = dma.done %s1339, 128
        $region48: #{tpu_custom_call.1} parent=43 // pred_fallthru
          _
      $region44: #{tpu_custom_call.1} parent=5 // pred_fallthru
        _
    $region6: #{tpu_custom_call.1} parent=1 // loop_footer
      %s19 = sadd.s32 1, %s15
    $region7: #{tpu_custom_call.1} parent=1 // loop_footer_branch
      %14 = sbr.rel target = $region3
    $region8: #{tpu_custom_call.1} parent=1 // loop_exit
      _
    %1344 = vsyncpa [#allocation3], 1
    %s1345 = scalar_lea.sflag [#allocation3], 1
    %1346 = vsyncpa %s1345, 1
    %1347 = vsyncpa [#allocation4], 1
    %s1348 = scalar_lea.sflag [#allocation4], 1
    %1349 = vsyncpa %s1348, 1

</llo_original>
